<compile_context>
chip_gen: v7x
topology: tpu7x:2x2x1
jax: 0.10.0
libtpu: 0.0.40
codegen_flags: <defaults>
</compile_context>

<pallas_src>
import functools

import jax
import jax.numpy as jnp
from jax.experimental import pallas as pl
from jax.experimental.pallas import tpu as pltpu

LANE = 128            # lane width (last dim of every tile)
MAX_TILE_ROWS = 8192  # 8192 * 128 * 4 B = 4 MiB per f32 input tile
NUM_CORE_SPLITS = 2   # shard the reduction across 2 TensorCores (v7x megacore)


def _msle_kernel(yh_ref, y_ref, out_ref, acc_ref, *,
                 nrows, tile_rows, tiles_per_core, needs_mask, use_single_log):
    """Grid = (core_split, row_tiles_per_core); axis 1 is the reduction sweep.

    yh_ref, y_ref : VMEM (tile_rows, LANE) tiles of y_hat / y (native dtype)
    out_ref       : VMEM (1, 8, LANE) per-core partial-sum block (broadcast scalar)
    acc_ref       : VMEM (8, LANE) f32 accumulator scratch
    """
    c = pl.program_id(0)   # core-split index (parallel)
    i = pl.program_id(1)   # row-tile index within this core's sweep (arbitrary)
    groups = tile_rows // 8

    @pl.when(i == 0)
    def _():
        acc_ref[...] = jnp.zeros_like(acc_ref)

    yh = yh_ref[...].astype(jnp.float32)
    yy = y_ref[...].astype(jnp.float32)

    def accumulate(a, b):
        if use_single_log:
            # One EUP log + one EUP recip + one VPU mul (not bit-identical to
            # log(a) - log(b); kept behind a flag).
            d = jnp.log(a * pl.reciprocal(b))
        else:
            d = jnp.log(a) - jnp.log(b)     # exact PyTorch formula
        # (8,128)-aligned reshape -> cross-vreg VPU adds into a single-vreg acc.
        acc_ref[...] += (d * d).reshape(groups, 8, LANE).sum(axis=0)

    if needs_mask:
        # Only edge / clamped-duplicate blocks pay for the mask; interior
        # blocks take the cheap branch.
        start_row = (c * tiles_per_core + i) * tile_rows
        is_edge = start_row + tile_rows > nrows

        @pl.when(jnp.logical_not(is_edge))
        def _():
            accumulate(yh, yy)

        @pl.when(is_edge)
        def _():
            # Mask is applied BEFORE the log so garbage in padded / duplicated
            # rows never reaches it: log(1) = 0 contributes nothing.
            row_ids = jax.lax.broadcasted_iota(
                jnp.int32, (tile_rows, LANE), 0) + start_row
            valid = row_ids < nrows
            accumulate(jnp.where(valid, yh, 1.0), jnp.where(valid, yy, 1.0))
    else:
        accumulate(yh, yy)

    @pl.when(i == pl.num_programs(1) - 1)
    def _():
        # Single cross-lane reduce per core, over one vreg, in the epilogue.
        total_c = jnp.sum(acc_ref[...])
        out_ref[...] = jnp.broadcast_to(total_c, (1, 8, LANE))


def msle_loss(y_hat: jax.Array, y: jax.Array, *,
              use_single_log: bool = False) -> jax.Array:
    """Mean squared logarithmic error matching the PyTorch MSLELoss module."""
    assert y_hat.shape == y.shape, "y_hat and y must have the same shape"
    n = y_hat.size
    out_dtype = y_hat.dtype

    flat_yh = y_hat.reshape(-1)
    flat_y = y.reshape(-1)

    nrows = n // LANE          # full 128-wide rows handled by the kernel
    n_main = nrows * LANE
    total = jnp.float32(0.0)

    if nrows > 0:
        # Zero-copy when n is a multiple of 128 (reshape only); otherwise slice
        # off the aligned prefix (tail handled below in plain JAX).
        yh_main = flat_yh if n_main == n else flat_yh[:n_main]
        y_main = flat_y if n_main == n else flat_y[:n_main]
        yh2 = yh_main.reshape(nrows, LANE)
        y2 = y_main.reshape(nrows, LANE)

        itemsize = jnp.dtype(y_hat.dtype).itemsize
        # Sublane packing: 8 rows (f32), 16 (bf16), 32 (int8/fp8).
        pack = max(8, 32 // max(itemsize, 1))
        tile_rows = min(MAX_TILE_ROWS, ((nrows + pack - 1) // pack) * pack)
        tiles_total = pl.cdiv(nrows, tile_rows)
        tiles_per_core = pl.cdiv(tiles_total, NUM_CORE_SPLITS)
        # Mask only when some block is partial or duplicated by the core split.
        needs_mask = (NUM_CORE_SPLITS * tiles_per_core * tile_rows) != nrows

        kernel = functools.partial(
            _msle_kernel,
            nrows=nrows,
            tile_rows=tile_rows,
            tiles_per_core=tiles_per_core,
            needs_mask=needs_mask,
            use_single_log=use_single_log,
        )

        def in_map(c, i):
            blk = c * tiles_per_core + i
            # Clamp fully out-of-range blocks onto the last valid block; the
            # in-kernel logical-index mask zeroes their contribution, and
            # consecutive identical block indices elide the extra DMA.
            return (jnp.minimum(blk, tiles_total - 1), 0)

        # VMEM budget: 2 inputs x 2 buffers x tile + headroom (accumulator and
        # output are tiny). ~24 MiB for f32/8192 tiles -> fits v5e (128 MiB
        # phys), v6e (128 MiB) and v7x (64 MiB phys / 32 MiB scoped).
        tile_bytes = tile_rows * LANE * itemsize
        vmem_limit = min(int(4 * tile_bytes + (8 << 20)), 30 << 20)

        partials = pl.pallas_call(
            kernel,
            out_shape=jax.ShapeDtypeStruct((NUM_CORE_SPLITS, 8, LANE), jnp.float32),
            grid_spec=pltpu.PrefetchScalarGridSpec(
                num_scalar_prefetch=0,
                grid=(NUM_CORE_SPLITS, tiles_per_core),
                in_specs=[
                    pl.BlockSpec((tile_rows, LANE), in_map),   # y_hat tiles
                    pl.BlockSpec((tile_rows, LANE), in_map),   # y tiles
                ],
                out_specs=pl.BlockSpec((1, 8, LANE), lambda c, i: (c, 0, 0)),
                scratch_shapes=[pltpu.VMEM((8, LANE), jnp.float32)],
            ),
            compiler_params=pltpu.CompilerParams(
                # outer axis: core split (v7x megacore); inner: reduction sweep
                dimension_semantics=("parallel", "arbitrary"),
                vmem_limit_bytes=vmem_limit,
            ),
        )(yh2, y2)

        total = total + jnp.sum(partials[:, 0, 0])

    # Ragged tail (< 128 elements) folded in with plain JAX — avoids copying
    # the whole array just to pad it.
    if n_main != n:
        dt = (jnp.log(flat_yh[n_main:].astype(jnp.float32))
              - jnp.log(flat_y[n_main:].astype(jnp.float32)))
        total = total + jnp.sum(dt * dt)

    return (total / jnp.float32(n)).astype(out_dtype)


if __name__ == "__main__":
    key = jax.random.PRNGKey(0)
    k1, k2, k3, k4 = jax.random.split(key, 4)

    # Main check: NCHW small synthetic shape, positive inputs (log requires >0).
    shape = (2, 4, 16, 16)
    y_hat = jax.random.uniform(k1, shape, jnp.float32, minval=0.1, maxval=5.0)
    y = jax.random.uniform(k2, shape, jnp.float32, minval=0.1, maxval=5.0)

    loss = msle_loss(y_hat, y)
    jax.block_until_ready(loss)
    ref = jnp.mean((jnp.log(y_hat) - jnp.log(y)) ** 2)
    assert jnp.allclose(loss, ref, rtol=1e-5, atol=1e-6), (loss, ref)

    # Second check: non-multiple-of-128 size exercises the masked edge block
    # and the plain-JAX ragged tail.
    shape2 = (2, 3, 50)
    y_hat2 = jax.random.uniform(k3, shape2, jnp.float32, minval=0.1, maxval=5.0)
    y2 = jax.random.uniform(k4, shape2, jnp.float32, minval=0.1, maxval=5.0)
    loss2 = msle_loss(y_hat2, y2)
    jax.block_until_ready(loss2)
    ref2 = jnp.mean((jnp.log(y_hat2) - jnp.log(y2)) ** 2)
    assert jnp.allclose(loss2, ref2, rtol=1e-5, atol=1e-6), (loss2, ref2)

    print("KERNEL_OK")
</pallas_src>

<mosaic_0001>
module attributes {stable_mosaic.version = 11 : i64} {
  func.func @_msle_kernel(%arg0: i32, %arg1: i32, %arg2: memref<16x128xf32, #tpu.memory_space<vmem>>, %arg3: memref<16x128xf32, #tpu.memory_space<vmem>>, %arg4: memref<1x8x128xf32, #tpu.memory_space<vmem>>, %arg5: memref<8x128xf32, #tpu.memory_space<vmem>>) attributes {dimension_semantics = [#tpu.dimension_semantics<parallel>, #tpu.dimension_semantics<arbitrary>], iteration_bounds = array<i64: 2, 1>, scalar_prefetch = 0 : i64, scratch_operands = 1 : i64, tpu.core_type = #tpu.core_type<tc>, window_params = [{transform_indices = @transform_0, window_bounds = array<i64: 16, 128>}, {transform_indices = @transform_1, window_bounds = array<i64: 16, 128>}, {transform_indices = @transform_2, window_bounds = array<i64: 1, 8, 128>}]} {
    %c0_i32 = arith.constant 0 : i32
    %0 = arith.cmpi eq, %arg1, %c0_i32 : i32
    %1 = arith.extui %0 : i1 to i32
    %c0_i32_0 = arith.constant 0 : i32
    %2 = arith.cmpi ne, %1, %c0_i32_0 : i32
    scf.if %2 {
      %cst = arith.constant 0.000000e+00 : f32
      %18 = vector.broadcast %cst : f32 to vector<8x128xf32>
      %c0_10 = arith.constant 0 : index
      %c0_11 = arith.constant 0 : index
      %19 = vector.load %arg5[%c0_10, %c0_11] : memref<8x128xf32, #tpu.memory_space<vmem>>, vector<8x128xf32>
      tpu.vector_store %arg5[%c0_10, %c0_11], %18 {strides = array<i32>} : memref<8x128xf32, #tpu.memory_space<vmem>>, vector<8x128xf32>,
    } else {
    }
    %c0 = arith.constant 0 : index
    %c0_1 = arith.constant 0 : index
    %3 = vector.load %arg2[%c0, %c0_1] : memref<16x128xf32, #tpu.memory_space<vmem>>, vector<16x128xf32>
    %c0_2 = arith.constant 0 : index
    %c0_3 = arith.constant 0 : index
    %4 = vector.load %arg3[%c0_2, %c0_3] : memref<16x128xf32, #tpu.memory_space<vmem>>, vector<16x128xf32>
    %c1_i32 = arith.constant 1 : i32
    %5 = arith.muli %arg0, %c1_i32 : i32
    %6 = arith.addi %5, %arg1 : i32
    %c16_i32 = arith.constant 16 : i32
    %7 = arith.muli %6, %c16_i32 : i32
    %c16_i32_4 = arith.constant 16 : i32
    %8 = arith.addi %7, %c16_i32_4 : i32
    %c16_i32_5 = arith.constant 16 : i32
    %9 = arith.cmpi sgt, %8, %c16_i32_5 : i32
    %true = arith.constant true
    %10 = arith.xori %9, %true : i1
    %11 = arith.extui %10 : i1 to i32
    %c0_i32_6 = arith.constant 0 : i32
    %12 = arith.cmpi ne, %11, %c0_i32_6 : i32
    scf.if %12 {
      %18 = math.log %3 : vector<16x128xf32>
      %19 = math.log %4 : vector<16x128xf32>
      %20 = arith.subf %18, %19 : vector<16x128xf32>
      %c0_10 = arith.constant 0 : index
      %c0_11 = arith.constant 0 : index
      %21 = vector.load %arg5[%c0_10, %c0_11] : memref<8x128xf32, #tpu.memory_space<vmem>>, vector<8x128xf32>
      %22 = arith.mulf %20, %20 : vector<16x128xf32>
      %23 = vector.shape_cast %22 : vector<16x128xf32> to vector<2x8x128xf32>
      %cst = arith.constant dense<0.000000e+00> : vector<8x128xf32>
      %24 = vector.multi_reduction <add>, %23, %cst [0] : vector<2x8x128xf32> to vector<8x128xf32>
      %25 = arith.addf %21, %24 : vector<8x128xf32>
      %c0_12 = arith.constant 0 : index
      %c0_13 = arith.constant 0 : index
      %26 = vector.load %arg5[%c0_12, %c0_13] : memref<8x128xf32, #tpu.memory_space<vmem>>, vector<8x128xf32>
      tpu.vector_store %arg5[%c0_12, %c0_13], %25 {strides = array<i32>} : memref<8x128xf32, #tpu.memory_space<vmem>>, vector<8x128xf32>,
    } else {
    }
    %13 = arith.extui %9 : i1 to i32
    %c0_i32_7 = arith.constant 0 : i32
    %14 = arith.cmpi ne, %13, %c0_i32_7 : i32
    scf.if %14 {
      %18 = tpu.iota {dimensions = array<i32: 0>} : vector<16x128xi32>
      %19 = vector.broadcast %7 : i32 to vector<16x128xi32>
      %20 = arith.addi %18, %19 : vector<16x128xi32>
      %c16_i32_10 = arith.constant 16 : i32
      %21 = vector.broadcast %c16_i32_10 : i32 to vector<16x128xi32>
      %22 = arith.cmpi slt, %20, %21 : vector<16x128xi32>
      %cst = arith.constant 1.000000e+00 : f32
      %23 = vector.broadcast %cst : f32 to vector<16x128xf32>
      %24 = arith.select %22, %3, %23 : vector<16x128xi1>, vector<16x128xf32>
      %cst_11 = arith.constant 1.000000e+00 : f32
      %25 = vector.broadcast %cst_11 : f32 to vector<16x128xf32>
      %26 = arith.select %22, %4, %25 : vector<16x128xi1>, vector<16x128xf32>
      %27 = math.log %24 : vector<16x128xf32>
      %28 = math.log %26 : vector<16x128xf32>
      %29 = arith.subf %27, %28 : vector<16x128xf32>
      %c0_12 = arith.constant 0 : index
      %c0_13 = arith.constant 0 : index
      %30 = vector.load %arg5[%c0_12, %c0_13] : memref<8x128xf32, #tpu.memory_space<vmem>>, vector<8x128xf32>
      %31 = arith.mulf %29, %29 : vector<16x128xf32>
      %32 = vector.shape_cast %31 : vector<16x128xf32> to vector<2x8x128xf32>
      %cst_14 = arith.constant dense<0.000000e+00> : vector<8x128xf32>
      %33 = vector.multi_reduction <add>, %32, %cst_14 [0] : vector<2x8x128xf32> to vector<8x128xf32>
      %34 = arith.addf %30, %33 : vector<8x128xf32>
      %c0_15 = arith.constant 0 : index
      %c0_16 = arith.constant 0 : index
      %35 = vector.load %arg5[%c0_15, %c0_16] : memref<8x128xf32, #tpu.memory_space<vmem>>, vector<8x128xf32>
      tpu.vector_store %arg5[%c0_15, %c0_16], %34 {strides = array<i32>} : memref<8x128xf32, #tpu.memory_space<vmem>>, vector<8x128xf32>,
    } else {
    }
    %c0_i32_8 = arith.constant 0 : i32
    %15 = arith.cmpi eq, %arg1, %c0_i32_8 : i32
    %16 = arith.extui %15 : i1 to i32
    %c0_i32_9 = arith.constant 0 : i32
    %17 = arith.cmpi ne, %16, %c0_i32_9 : i32
    scf.if %17 {
      %c0_10 = arith.constant 0 : index
      %c0_11 = arith.constant 0 : index
      %18 = vector.load %arg5[%c0_10, %c0_11] : memref<8x128xf32, #tpu.memory_space<vmem>>, vector<8x128xf32>
      %19 = vector.shape_cast %18 : vector<8x128xf32> to vector<1x8x128xf32>
      %cst = arith.constant dense<0.000000e+00> : vector<1xf32>
      %20 = vector.multi_reduction <add>, %19, %cst [1, 2] : vector<1x8x128xf32> to vector<1xf32>
      %21 = vector.shape_cast %20 : vector<1xf32> to vector<1x1x1xf32>
      %22 = vector.extract %21[0, 0, 0] : f32 from vector<1x1x1xf32>
      %23 = vector.broadcast %22 : f32 to vector<1x8x128xf32>
      %c0_12 = arith.constant 0 : index
      %c0_13 = arith.constant 0 : index
      %c0_14 = arith.constant 0 : index
      %24 = vector.load %arg4[%c0_12, %c0_13, %c0_14] : memref<1x8x128xf32, #tpu.memory_space<vmem>>, vector<1x8x128xf32>
      tpu.vector_store %arg4[%c0_12, %c0_13, %c0_14], %23 {strides = array<i32>} : memref<1x8x128xf32, #tpu.memory_space<vmem>>, vector<1x8x128xf32>,
    } else {
    }
    return
  }
  func.func @transform_0(%arg0: i32, %arg1: i32) -> (i32, i32) {
    %c1_i32 = arith.constant 1 : i32
    %0 = arith.muli %arg0, %c1_i32 : i32
    %1 = arith.addi %0, %arg1 : i32
    %c0_i32 = arith.constant 0 : i32
    %2 = arith.minsi %1, %c0_i32 : i32
    %c0_i32_0 = arith.constant 0 : i32
    %c0_i32_1 = arith.constant 0 : i32
    return %2, %c0_i32_0 : i32, i32
  }
  func.func @transform_1(%arg0: i32, %arg1: i32) -> (i32, i32) {
    %c1_i32 = arith.constant 1 : i32
    %0 = arith.muli %arg0, %c1_i32 : i32
    %1 = arith.addi %0, %arg1 : i32
    %c0_i32 = arith.constant 0 : i32
    %2 = arith.minsi %1, %c0_i32 : i32
    %c0_i32_0 = arith.constant 0 : i32
    %c0_i32_1 = arith.constant 0 : i32
    return %2, %c0_i32_0 : i32, i32
  }
  func.func @transform_2(%arg0: i32, %arg1: i32) -> (i32, i32, i32) {
    %c0_i32 = arith.constant 0 : i32
    %c0_i32_0 = arith.constant 0 : i32
    %c0_i32_1 = arith.constant 0 : i32
    return %arg0, %c0_i32, %c0_i32_0 : i32, i32, i32
  }
}

</mosaic_0001>

<llo_original>
// kernel: tpu_custom_call.1
$region0: #{tpu_custom_call.1}
  #allocation0 [shape = 'u32[]', space=smem, size = 0x4, offset = 0x4, fixed_abs, tag = 'smem constant byte address 0x4 - core index']
  #allocation1 [shape = 'u32[144,128]{1,0:T(1,128)}', space=vmem, size = 0x12000, scoped, tag = 'internal scratch']
  #allocation2 [shape = 'f32[8,128]{1,0:T(8,128)}', space=vmem, size = 0x1000, scoped, tag = 'scratch operand']
  %s0 = inlined_call_operand.hbm [shape: f32[16,128], index: 0, kind: input, shape index: {}]
  %s1 = inlined_call_operand.hbm [shape: f32[16,128], index: 1, kind: input, shape index: {}]
  %s2 = inlined_call_operand.hbm [shape: f32[2,8,128], index: 2, kind: output, shape index: {}]
  %s3 = sld [smem:[#allocation0]]
  $region65: #{tpu_custom_call.1} parent=0
    _
  %s5 = ssub.s32 1, %s3
  %s6 = scalar_select 0, %s5, %s3
  $region1: #{tpu_custom_call.1} parent=0
    #allocation3 [shape = 'u8[16384]{0}', space=vmem, size = 0x4000, scoped, tag = 'input window, operand 0']
    #allocation4 [shape = 's32[2]{0}', space=sflag, size = 0x8, scoped, tag = 'scoped memory for tpu_custom_call.1']
    #allocation5 [shape = 's32[2]{0}', space=sflag, size = 0x8, scoped, tag = 'scoped memory for tpu_custom_call.1']
    #allocation6 [shape = 'u8[16384]{0}', space=vmem, size = 0x4000, scoped, tag = 'input window, operand 1']
    #allocation7 [shape = 's32[2]{0}', space=sflag, size = 0x8, scoped, tag = 'scoped memory for tpu_custom_call.1']
    #allocation8 [shape = 'u8[8192]{0}', space=vmem, size = 0x2000, scoped, tag = 'output window, operand 0']
    %7 = vsyncpa [#allocation4], 0
    %s8 = scalar_lea.sflag [#allocation4], 1
    %9 = vsyncpa %s8, 0
    %10 = vsyncpa [#allocation7], 0
    %s11 = scalar_lea.sflag [#allocation7], 1
    %12 = vsyncpa %s11, 0
    %13 = vsyncpa [#allocation5], 0
    %s14 = scalar_lea.sflag [#allocation5], 1
    %15 = vsyncpa %s14, 0
    loop: start=0, step=1, limit=4
    $region2: #{tpu_custom_call.1} parent=1 // loop_pre_header
      _
    $region3: #{tpu_custom_call.1} parent=1 // loop_header
      %s17 = sphi 0, %s21
      %p18 = scmp.ge.s32.totalorder %s17, 4
      %s24 = sphi 0, %s36
      %s25 = sphi 0, %s32
      %s26 = sphi 0, %s24
      %s27 = sphi 0, %s25
      %s28 = sphi 0, %s26
      %s29 = sphi 0, %s27
      %s45 = sphi 0, %s47
      %s48 = sphi 0, %s45
      %s49 = sphi 0, %s48
      %s65 = sphi 0, %s49
      %s77 = sphi 0, %s79
      %s80 = sphi 0, %s77
      %s81 = sphi 0, %s80
      %s97 = sphi 0, %s81
      %s103 = sphi 0, %s105
      %s106 = sphi 0, %s103
      %s107 = sphi 0, %s106
      %s123 = sphi 0, %s107
    $region4: #{tpu_custom_call.1} parent=1 // loop_header_branch
      %20 = sbr.rel (%p18) target = $region8
    $region5: #{tpu_custom_call.1} parent=1 // loop_body
      %s22 = ssub.s32 %s17, 1
      %s23 = ssub.s32 %s17, 2
      %s30 = sadd.s32 1, %s25
      %p31 = scmp.ge.s32.totalorder %s30, 1
      %s32 = scalar_select %p31, 0, %s30
      %s33 = sadd.s32 1, %s24
      %s34 = scalar_select %p31, %s33, %s24
      %p35 = scmp.ge.s32.totalorder %s34, 2
      %s36 = scalar_select %p35, 0, %s34
      %s37 = sadd.s32 %s24, %s25
      %p38 = scmp.lt.s32.totalorder %s37, 0
      %s39 = scalar_select %p38, %s37, 0
      %s40 = sadd.s32 %s36, %s32
      %p41 = scmp.lt.s32.totalorder %s40, 0
      %s42 = scalar_select %p41, %s40, 0
      %s43 = ssub.s32 %s39, %s42
      %p44 = scmp.eq.s32.totalorder %s43, 0
      %s46 = sadd.s32 %s45, 1
      %s47 = scalar_select %p44, %s45, %s46
      %p50 = pneg %p44
      %p51 = scmp.eq.s32.totalorder %s17, 1
      %p52 = por %p50, %p51
      %p53 = scmp.ne.s32.totalorder %s45, %s48
      %p54 = scmp.eq.s32.totalorder %s17, 0
      %p55 = por %p53, %p54
      %p56 = scmp.ne.s32.totalorder %s45, %s48
      %p57 = scmp.eq.s32.totalorder %s22, 1
      %p58 = por %p56, %p57
      %p59 = scmp.ne.s32.totalorder %s48, %s49
      %p60 = scmp.eq.s32.totalorder %s22, 0
      %p61 = por %p59, %p60
      %p62 = scmp.ne.s32.totalorder %s48, %s49
      %p63 = scmp.eq.s32.totalorder %s23, 1
      %p64 = por %p62, %p63
      %p66 = scmp.ne.s32.totalorder %s49, %s65
      %p67 = scmp.eq.s32.totalorder %s23, 0
      %p68 = por %p66, %p67
      %s69 = sadd.s32 %s24, %s25
      %p70 = scmp.lt.s32.totalorder %s69, 0
      %s71 = scalar_select %p70, %s69, 0
      %s72 = sadd.s32 %s36, %s32
      %p73 = scmp.lt.s32.totalorder %s72, 0
      %s74 = scalar_select %p73, %s72, 0
      %s75 = ssub.s32 %s71, %s74
      %p76 = scmp.eq.s32.totalorder %s75, 0
      %s78 = sadd.s32 %s77, 1
      %s79 = scalar_select %p76, %s77, %s78
      %p82 = pneg %p76
      %p83 = scmp.eq.s32.totalorder %s17, 1
      %p84 = por %p82, %p83
      %p85 = scmp.ne.s32.totalorder %s77, %s80
      %p86 = scmp.eq.s32.totalorder %s17, 0
      %p87 = por %p85, %p86
      %p88 = scmp.ne.s32.totalorder %s77, %s80
      %p89 = scmp.eq.s32.totalorder %s22, 1
      %p90 = por %p88, %p89
      %p91 = scmp.ne.s32.totalorder %s80, %s81
      %p92 = scmp.eq.s32.totalorder %s22, 0
      %p93 = por %p91, %p92
      %p94 = scmp.ne.s32.totalorder %s80, %s81
      %p95 = scmp.eq.s32.totalorder %s23, 1
      %p96 = por %p94, %p95
      %p98 = scmp.ne.s32.totalorder %s81, %s97
      %p99 = scmp.eq.s32.totalorder %s23, 0
      %p100 = por %p98, %p99
      %s101 = ssub.s32 %s24, %s36
      %p102 = scmp.eq.s32.totalorder %s101, 0
      %s104 = sadd.s32 %s103, 1
      %s105 = scalar_select %p102, %s103, %s104
      %p108 = pneg %p102
      %p109 = scmp.eq.s32.totalorder %s17, 1
      %p110 = por %p108, %p109
      %p111 = scmp.ne.s32.totalorder %s103, %s106
      %p112 = scmp.eq.s32.totalorder %s17, 0
      %p113 = por %p111, %p112
      %p114 = scmp.ne.s32.totalorder %s103, %s106
      %p115 = scmp.eq.s32.totalorder %s22, 1
      %p116 = por %p114, %p115
      %p117 = scmp.ne.s32.totalorder %s106, %s107
      %p118 = scmp.eq.s32.totalorder %s22, 0
      %p119 = por %p117, %p118
      %p120 = scmp.ne.s32.totalorder %s106, %s107
      %p121 = scmp.eq.s32.totalorder %s23, 1
      %p122 = por %p120, %p121
      %p124 = scmp.ne.s32.totalorder %s107, %s123
      %p125 = scmp.eq.s32.totalorder %s23, 0
      %p126 = por %p124, %p125
      %p127 = scmp.le.s32.totalorder 1, %s17
      %p128 = scmp.lt.s32.totalorder %s17, 3
      %p129 = pnand %p127, %p128
      %p130 = pneg %p129
      // Predicated region
      $region9: #{tpu_custom_call.1} parent=5 // pred_check
        _
      $region10: #{tpu_custom_call.1} parent=5 // pred_check_branch
        %132 = sbr.rel (%p129) target = $region12
      $region11: #{tpu_custom_call.1} parent=5 // pred_region
        %s133 = ssub.s32 %s17, 1
      $region12: #{tpu_custom_call.1} parent=5 // pred_fallthru
        _
      %p134 = scmp.lt.s32.totalorder %s17, 2
      // Predicated region
      $region13: #{tpu_custom_call.1} parent=5 // pred_check
        %p135 = pneg %p134
      $region14: #{tpu_custom_call.1} parent=5 // pred_check_branch
        %137 = sbr.rel (%p135) target = $region16
      $region15: #{tpu_custom_call.1} parent=5 // pred_region
        // Predicated region
        $region17: #{tpu_custom_call.1} parent=15 // pred_check
          %p138 = pneg %p55
        $region18: #{tpu_custom_call.1} parent=15 // pred_check_branch
          %140 = sbr.rel (%p138) target = $region20
        $region19: #{tpu_custom_call.1} parent=15 // pred_region
          %s141 = sand.u32 %s45, 1
          %s142 = scalar_lea.sflag [#allocation4], %s141
          %s143 = sand.u32 %s45, 1
          %s144 = smul.addr %s143, 16
          %s145 = scalar_lea.vmem [#allocation3], %s144
          %s146 = sadd.s32 %s24, %s25
          %p147 = scmp.lt.s32.totalorder %s146, 0
          %s148 = scalar_select %p147, %s146, 0
          %s149 = smul.u32 2, %s148
          %s151 = ssub.s32 256, 256
          %152 = vsyncadd %s142, %s151
          %s153 = smul.addr %s149, 128
          %s154 = scalar_lea.hbm %s0, %s153
          %s155 = sshll.u32 %s145, 4
          %s156 = int_to_ptr.vmem [resolvable:$true] %s155
          %161 = dma.hbm_to_vmem [thread:$0]  %s154, 256, %s156, %s142, 128, 128, 8
        $region20: #{tpu_custom_call.1} parent=15 // pred_fallthru
          _
        // Predicated region
        $region21: #{tpu_custom_call.1} parent=15 // pred_check
          %p162 = pneg %p87
        $region22: #{tpu_custom_call.1} parent=15 // pred_check_branch
          %164 = sbr.rel (%p162) target = $region24
        $region23: #{tpu_custom_call.1} parent=15 // pred_region
          %s165 = sand.u32 %s77, 1
          %s166 = scalar_lea.sflag [#allocation7], %s165
          %s167 = sand.u32 %s77, 1
          %s168 = smul.addr %s167, 16
          %s169 = scalar_lea.vmem [#allocation6], %s168
          %s170 = sadd.s32 %s24, %s25
          %p171 = scmp.lt.s32.totalorder %s170, 0
          %s172 = scalar_select %p171, %s170, 0
          %s173 = smul.u32 2, %s172
          %s175 = ssub.s32 256, 256
          %176 = vsyncadd %s166, %s175
          %s177 = smul.addr %s173, 128
          %s178 = scalar_lea.hbm %s1, %s177
          %s179 = sshll.u32 %s169, 4
          %s180 = int_to_ptr.vmem [resolvable:$true] %s179
          %185 = dma.hbm_to_vmem [thread:$0]  %s178, 256, %s180, %s166, 128, 128, 8
        $region24: #{tpu_custom_call.1} parent=15 // pred_fallthru
          _
      $region16: #{tpu_custom_call.1} parent=5 // pred_fallthru
        _
      %p186 = scmp.le.s32.totalorder 1, %s17
      %p187 = scmp.lt.s32.totalorder %s17, 3
      %p188 = pnand %p186, %p187
      %p189 = pneg %p188
      // Predicated region
      $region25: #{tpu_custom_call.1} parent=5 // pred_check
        _
      $region26: #{tpu_custom_call.1} parent=5 // pred_check_branch
        %191 = sbr.rel (%p188) target = $region28
      $region27: #{tpu_custom_call.1} parent=5 // pred_region
        %s192 = ssub.s32 %s17, 1
        %s193 = sand.u32 %s48, 1
        %s194 = scalar_lea.sflag [#allocation4], %s193
        %s195 = sand.u32 %s48, 1
        %s196 = smul.addr %s195, 16
        %s197 = scalar_lea.vmem [#allocation3], %s196
        // Predicated region
        $region29: #{tpu_custom_call.1} parent=27 // pred_check
          %p198 = pneg %p61
        $region30: #{tpu_custom_call.1} parent=27 // pred_check_branch
          %200 = sbr.rel (%p198) target = $region32
        $region31: #{tpu_custom_call.1} parent=27 // pred_region
          %201 = dma.done %s194, 256
        $region32: #{tpu_custom_call.1} parent=27 // pred_fallthru
          _
        %s202 = sand.u32 %s80, 1
        %s203 = scalar_lea.sflag [#allocation7], %s202
        %s204 = sand.u32 %s80, 1
        %s205 = smul.addr %s204, 16
        %s206 = scalar_lea.vmem [#allocation6], %s205
        // Predicated region
        $region33: #{tpu_custom_call.1} parent=27 // pred_check
          %p207 = pneg %p93
        $region34: #{tpu_custom_call.1} parent=27 // pred_check_branch
          %209 = sbr.rel (%p207) target = $region36
        $region35: #{tpu_custom_call.1} parent=27 // pred_region
          %210 = dma.done %s203, 256
        $region36: #{tpu_custom_call.1} parent=27 // pred_fallthru
          _
        %s211 = sand.u32 %s48, 1
        %s212 = scalar_lea.sflag [#allocation4], %s211
        %s213 = sand.u32 %s48, 1
        %s214 = smul.addr %s213, 16
        %s215 = scalar_lea.vmem [#allocation3], %s214
        %p216 = pneg %p61
        %p217 = pneg %p58
        %s218 = sand.u32 %s80, 1
        %s219 = scalar_lea.sflag [#allocation7], %s218
        %s220 = sand.u32 %s80, 1
        %s221 = smul.addr %s220, 16
        %s222 = scalar_lea.vmem [#allocation6], %s221
        %p223 = pneg %p93
        %p224 = pneg %p90
        %p225 = pneg %p119
        %p226 = pneg %p116
        %s227 = sand.u32 %s106, 1
        %s228 = scalar_lea.sflag [#allocation5], %s227
        %s229 = sand.u32 %s106, 1
        %s230 = smul.addr %s229, 8
        %s231 = scalar_lea.vmem [#allocation8], %s230
        %s232 = sadd.s32 %s26, %s27
        %p233 = scmp.lt.s32.totalorder %s232, 0
        %s234 = scalar_select %p233, %s232, 0
        %s235 = smul.u32 2, %s234
        %s236 = sadd.s32 %s26, %s27
        %p237 = scmp.lt.s32.totalorder %s236, 0
        %s238 = scalar_select %p237, %s236, 0
        %s239 = smul.u32 2, %s238
        %p240 = scmp.eq.s32.totalorder %s27, 0
        // Predicated region
        $region37: #{tpu_custom_call.1} parent=27 // pred_check
          %p241 = pneg %p240
        $region38: #{tpu_custom_call.1} parent=27 // pred_check_branch
          %243 = sbr.rel (%p241) target = $region40
        $region39: #{tpu_custom_call.1} parent=27 // pred_region
          %244 = vst [vmem:[#allocation2] sm:$0xff] 0.0
        $region40: #{tpu_custom_call.1} parent=27 // pred_fallthru
          _
        %v245 = vld [vmem:[%s197] sm:$0xff]
        %v246 = vld [vmem:[%s197 + $0x8] sm:$0xff]
        %v247 = vld [vmem:[%s206] sm:$0xff]
        %v248 = vld [vmem:[%s206 + $0x8] sm:$0xff]
        %s249 = sadd.s32 %s26, %s27
        %s250 = smul.u32 %s249, 16
        %s251 = sadd.s32 %s250, 16
        %p252 = scmp.gt.s32.totalorder %s251, 16
        %p253 = scmp.le.s32.totalorder %s251, 16
        // Predicated region
        $region41: #{tpu_custom_call.1} parent=27 // pred_check
          %p254 = pneg %p253
        $region42: #{tpu_custom_call.1} parent=27 // pred_check_branch
          %256 = sbr.rel (%p254) target = $region44
        $region43: #{tpu_custom_call.1} parent=27 // pred_region
          %v257 = vlog2.pop %v245
          %v258 = vmul.f32 %v257, 0.6931472
          %v259 = vlog2.pop %v246
          %v260 = vmul.f32 %v259, 0.6931472
          %v261 = vlog2.pop %v247
          %v262 = vmul.f32 %v261, 0.6931472
          %v263 = vlog2.pop %v248
          %v264 = vmul.f32 %v263, 0.6931472
          %v265 = vsub.f32 %v258, %v262
          %v266 = vsub.f32 %v260, %v264
          %v267 = vld [vmem:[#allocation2] sm:$0xff]
          %v268 = vmul.f32 %v265, %v265
          %v269 = vmul.f32 %v266, %v266
          %v270 = vadd.f32 %v268, %v269
          %v271 = vadd.f32 %v267, %v270
          %272 = vst [vmem:[#allocation2] sm:$0xff] %v271
        $region44: #{tpu_custom_call.1} parent=27 // pred_fallthru
          _
        // Predicated region
        $region45: #{tpu_custom_call.1} parent=27 // pred_check
          %p273 = pneg %p252
        $region46: #{tpu_custom_call.1} parent=27 // pred_check_branch
          %275 = sbr.rel (%p273) target = $region48
        $region47: #{tpu_custom_call.1} parent=27 // pred_region
          %v276 = vlaneseq
          %v277 = vshrl.u32 %v276, 7
          %v278 = vadd.s32 %v277, 8
          %v279 = vstv %s250
          %v280 = vadd.s32 %v277, %v279
          %v281 = vadd.s32 %v278, %v279
          %vm282 = vcmp.lt.s32.totalorder %v280, 16
          %vm283 = vcmp.lt.s32.totalorder %v281, 16
          %v284 = vsel %vm282, %v245, 1.0
          %v285 = vsel %vm283, %v246, 1.0
          %v286 = vsel %vm282, %v247, 1.0
          %v287 = vsel %vm283, %v248, 1.0
          %v288 = vlog2.pop %v284
          %v289 = vmul.f32 %v288, 0.6931472
          %v290 = vlog2.pop %v285
          %v291 = vmul.f32 %v290, 0.6931472
          %v292 = vlog2.pop %v286
          %v293 = vmul.f32 %v292, 0.6931472
          %v294 = vlog2.pop %v287
          %v295 = vmul.f32 %v294, 0.6931472
          %v296 = vsub.f32 %v289, %v293
          %v297 = vsub.f32 %v291, %v295
          %v298 = vld [vmem:[#allocation2] sm:$0xff]
          %v299 = vmul.f32 %v296, %v296
          %v300 = vmul.f32 %v297, %v297
          %v301 = vadd.f32 %v299, %v300
          %v302 = vadd.f32 %v298, %v301
          %303 = vst [vmem:[#allocation2] sm:$0xff] %v302
        $region48: #{tpu_custom_call.1} parent=27 // pred_fallthru
          _
        // Predicated region
        $region49: #{tpu_custom_call.1} parent=27 // pred_check
          %p304 = pneg %p240
        $region50: #{tpu_custom_call.1} parent=27 // pred_check_branch
          %306 = sbr.rel (%p304) target = $region52
        $region51: #{tpu_custom_call.1} parent=27 // pred_region
          %v307 = vld [vmem:[#allocation2] sm:$0xff]
          %308 = vadd.xlane.f32.xlu0 %v307
          %v309 = vpop.xlane.xlu0 %308
          %v310 = vrot.slane %v309, 4
          %v311 = vadd.f32 %v309, %v310
          %v312 = vrot.slane %v311, 2
          %v313 = vadd.f32 %v311, %v312
          %v314 = vrot.slane %v313, 1
          %v315 = vadd.f32 %v313, %v314
          %s316 = vtos %v315
          %v317 = vstv %s316
          %318 = vst [vmem:[%s231] sm:$0xff] %v317
        $region52: #{tpu_custom_call.1} parent=27 // pred_fallthru
          _
        %s319 = sand.u32 %s106, 1
        %s320 = scalar_lea.sflag [#allocation5], %s319
        %s321 = sand.u32 %s106, 1
        %s322 = smul.addr %s321, 8
        %s323 = scalar_lea.vmem [#allocation8], %s322
        // Predicated region
        $region53: #{tpu_custom_call.1} parent=27 // pred_check
          %p324 = pneg %p116
        $region54: #{tpu_custom_call.1} parent=27 // pred_check_branch
          %326 = sbr.rel (%p324) target = $region56
        $region55: #{tpu_custom_call.1} parent=27 // pred_region
          %s328 = ssub.s32 128, 128
          %329 = vsyncadd %s320, %s328
          %s330 = smul.addr %s26, 128
          %s331 = scalar_lea.hbm %s2, %s330
          %s333 = sshll.u32 %s323, 4
          %s334 = int_to_ptr.vmem [resolvable:$true] %s333
          %336 = dma.vmem_to_hbm [thread:$0]  %s334, 128, %s331, %s320
        $region56: #{tpu_custom_call.1} parent=27 // pred_fallthru
          _
      $region28: #{tpu_custom_call.1} parent=5 // pred_fallthru
        _
      %p337 = scmp.le.s32.totalorder 2, %s17
      // Predicated region
      $region57: #{tpu_custom_call.1} parent=5 // pred_check
        %p338 = pneg %p337
      $region58: #{tpu_custom_call.1} parent=5 // pred_check_branch
        %340 = sbr.rel (%p338) target = $region60
      $region59: #{tpu_custom_call.1} parent=5 // pred_region
        %s341 = ssub.s32 %s17, 2
        // Predicated region
        $region61: #{tpu_custom_call.1} parent=59 // pred_check
          %p342 = pneg %p122
        $region62: #{tpu_custom_call.1} parent=59 // pred_check_branch
          %344 = sbr.rel (%p342) target = $region64
        $region63: #{tpu_custom_call.1} parent=59 // pred_region
          %s345 = sand.u32 %s107, 1
          %s346 = scalar_lea.sflag [#allocation5], %s345
          %s347 = sand.u32 %s107, 1
          %s348 = smul.addr %s347, 8
          %s349 = scalar_lea.vmem [#allocation8], %s348
          %350 = dma.done %s346, 128
        $region64: #{tpu_custom_call.1} parent=59 // pred_fallthru
          _
      $region60: #{tpu_custom_call.1} parent=5 // pred_fallthru
        _
    $region6: #{tpu_custom_call.1} parent=1 // loop_footer
      %s21 = sadd.s32 1, %s17
    $region7: #{tpu_custom_call.1} parent=1 // loop_footer_branch
      %16 = sbr.rel target = $region3
    $region8: #{tpu_custom_call.1} parent=1 // loop_exit
      _
    %351 = vsyncpa [#allocation4], 1
    %s352 = scalar_lea.sflag [#allocation4], 1
    %353 = vsyncpa %s352, 1
    %354 = vsyncpa [#allocation7], 1
    %s355 = scalar_lea.sflag [#allocation7], 1
    %356 = vsyncpa %s355, 1
    %357 = vsyncpa [#allocation5], 1
    %s358 = scalar_lea.sflag [#allocation5], 1
    %359 = vsyncpa %s358, 1

</llo_original>
